<compile_context>
chip_gen: v6e
topology: v6e:2x2x1
jax: 0.10.0
libtpu: 0.0.40
codegen_flags: <defaults>
</compile_context>

<pallas_src>
import functools

import jax
import jax.numpy as jnp
from jax.experimental import pallas as pl
from jax.experimental.pallas import tpu as pltpu


def _lstm_cell_kernel(xh_ref, w_ref, c0_ref, c1_ref, h1_ref, acc_ref, *, tn):
    """One (batch_tile, hidden_tile, k_tile) grid step.

    xh_ref : [tb, tk]     rows of [x; h0]^T                 (compute dtype)
    w_ref  : [tk, 4*tn]   gate-interleaved weight slab tile (compute dtype)
    c0_ref : [tb, tn]     f32
    c1_ref : [tb, tn]     out
    h1_ref : [tb, tn]     out
    acc_ref: [tb, 4*tn]   f32 scratch accumulator (lives across k tiles)
    """
    k = pl.program_id(2)

    @pl.when(k == 0)
    def _():
        acc_ref[...] = jnp.zeros_like(acc_ref)

    # Single fused MXU matmul covering all four gates of this hidden slice
    # for this K-slice; f32 accumulation.
    acc_ref[...] += jnp.dot(xh_ref[...], w_ref[...],
                            preferred_element_type=jnp.float32)

    @pl.when(k == pl.num_programs(2) - 1)
    def _():
        z = acc_ref[...]                        # [tb, 4*tn] f32 preactivations
        i = jax.nn.sigmoid(z[:, 0 * tn:1 * tn])
        f = jax.nn.sigmoid(z[:, 1 * tn:2 * tn])
        o = jax.nn.sigmoid(z[:, 2 * tn:3 * tn])
        c = jnp.tanh(z[:, 3 * tn:4 * tn])

        c1 = f * c0_ref[...] + i * c            # f32 cell update
        h1 = o * jnp.tanh(c1)

        c1_ref[...] = c1.astype(c1_ref.dtype)
        h1_ref[...] = h1.astype(h1_ref.dtype)


def _vmem_capacity_bytes():
    """Physical VMEM of the current chip (generation-aware tiling)."""
    try:
        return int(pltpu.get_tpu_info().vmem_capacity_bytes)
    except Exception:                      # query unavailable
        return 64 * 1024 * 1024            # conservative: v7x per-core VMEM


def _vmem_footprint(tb, tn, tk, w_itemsize, x_itemsize):
    """Per-step VMEM bytes with default double buffering of inputs/outputs."""
    buf = 2
    w_tile = buf * tk * 4 * tn * w_itemsize
    xh_tile = buf * tb * tk * x_itemsize
    c0_tile = buf * tb * tn * 4
    out_tiles = buf * 2 * tb * tn * 4
    acc = tb * 4 * tn * 4
    return w_tile + xh_tile + c0_tile + out_tiles + acc


def _pick_tiles(batch, k_dim, hidden, w_itemsize, x_itemsize, vmem_budget):
    """Pick (tb, tn, tk) respecting the (8,128) layout rule and the budget."""
    # Batch: a single batch tile avoids re-streaming the weight slab (the
    # dominant HBM stream at small batch); only split a huge batch.
    tb = batch
    if batch > 1024 and batch % 256 == 0:
        tb = 256

    # Hidden / N tiling: keep the whole 4H slab when hidden is small or not
    # lane-aligned; otherwise a 128-multiple tn keeps gate slices lane-aligned,
    # gives a second parallel axis (v7x megacore) and an overlappable epilogue.
    if hidden % 128 != 0 or hidden <= 512:
        tn = hidden
    else:
        tn = 128
        for cand in (512, 384, 256, 128):
            if hidden % cand == 0:
                tn = cand
                break

    def fits(tk_):
        return _vmem_footprint(tb, tn, tk_, w_itemsize, x_itemsize) <= vmem_budget

    # K tiling: largest lane-aligned divisor of K that fits the budget
    # (fewer grid steps, bigger DMAs, fewer f32 acc read-modify-writes).
    if k_dim % 128 != 0:
        tk = k_dim                          # full dim is always legal
    else:
        divisors = [d for d in range(k_dim, 127, -128) if k_dim % d == 0]
        tk = divisors[-1]                   # smallest lane-aligned divisor
        for d in divisors:
            if fits(d):
                tk = d
                break

    # If even the smallest lane-aligned K tile overflows, shrink tn further.
    while not fits(tk) and tn % 256 == 0:
        tn //= 2

    return tb, tn, tk


def lstm_cell(w, x, u, h0, c0, *, compute_dtype=jnp.bfloat16,
              out_dtype=jnp.float32):
    """Fused LSTM cell matching FineGrainedOpLstmCell.forward().

    w  : [4, hidden, in_dim]
    x  : [in_dim, batch]
    u  : [4, hidden, hidden]
    h0 : [hidden, batch]
    c0 : [hidden, batch]
    Returns (c1, h1), each [hidden, batch] in out_dtype.
    """
    four, hidden, in_dim = w.shape
    assert four == 4
    batch = x.shape[1]
    K = in_dim + hidden
    H4 = 4 * hidden

    w_itemsize = jnp.dtype(compute_dtype).itemsize
    x_itemsize = w_itemsize
    vmem_cap = _vmem_capacity_bytes()
    tb, tn, tk = _pick_tiles(batch, K, hidden, w_itemsize, x_itemsize,
                             vmem_budget=int(vmem_cap * 0.75))
    nb, nn, nk = batch // tb, hidden // tn, K // tk
    grid = (nb, nn, nk)

    # Layout plumbing (cheap one-off XLA ops; hoist out of any time loop):
    #  * w_cat[K, 4H] with gate-interleaved columns: for hidden tile n the
    #    contiguous column block n*4*tn:(n+1)*4*tn holds the [i|f|o|c] slices
    #    of hidden units n*tn:(n+1)*tn, so one (tk, 4*tn) block carries all
    #    four gates of that hidden slice.
    #  * xh_t[batch, K]: columns 0:in_dim = x^T, in_dim:K = h0^T.
    a = jnp.concatenate([w, u], axis=2)                 # [4, H, K]
    a = a.reshape(4, nn, tn, K)
    w_cat = jnp.transpose(a, (3, 1, 0, 2)).reshape(K, H4).astype(compute_dtype)
    xh_t = jnp.concatenate([x, h0], axis=0).T.astype(compute_dtype)
    c0_t = c0.T.astype(jnp.float32)

    kernel = functools.partial(_lstm_cell_kernel, tn=tn)

    footprint = _vmem_footprint(tb, tn, tk, w_itemsize, x_itemsize)
    vmem_limit = min(int(vmem_cap * 0.9),
                     max(footprint + (8 << 20), 32 << 20))

    # Scheduler hint.  With the (b, n, k) grid order the weight slab is
    # re-streamed from HBM once per batch tile and xh once per hidden tile.
    flops = 2 * batch * K * H4 + 10 * batch * hidden
    transcendentals = 5 * batch * hidden
    bytes_accessed = (nb * K * H4 * w_itemsize
                      + nn * batch * K * x_itemsize
                      + batch * hidden * 4
                      + 2 * batch * hidden * jnp.dtype(out_dtype).itemsize)

    c1_t, h1_t = pl.pallas_call(
        kernel,
        out_shape=(
            jax.ShapeDtypeStruct((batch, hidden), out_dtype),
            jax.ShapeDtypeStruct((batch, hidden), out_dtype),
        ),
        grid_spec=pltpu.PrefetchScalarGridSpec(
            num_scalar_prefetch=0,
            grid=grid,
            in_specs=[
                pl.BlockSpec((tb, tk), lambda b, n, k: (b, k)),      # [x;h0]^T
                pl.BlockSpec((tk, 4 * tn), lambda b, n, k: (k, n)),  # weights
                pl.BlockSpec((tb, tn), lambda b, n, k: (b, n)),      # c0^T
            ],
            out_specs=(
                pl.BlockSpec((tb, tn), lambda b, n, k: (b, n)),      # c1^T
                pl.BlockSpec((tb, tn), lambda b, n, k: (b, n)),      # h1^T
            ),
            scratch_shapes=[pltpu.VMEM((tb, 4 * tn), jnp.float32)],
        ),
        compiler_params=pltpu.CompilerParams(
            dimension_semantics=("parallel", "parallel", "arbitrary"),
            vmem_limit_bytes=vmem_limit),
        cost_estimate=pl.CostEstimate(
            flops=flops,
            transcendentals=transcendentals,
            bytes_accessed=bytes_accessed),
    )(xh_t, w_cat, c0_t)

    # Back to the module's [hidden, batch] convention.  For a recurrent time
    # loop, keep h/c in the [batch, hidden] lane-dense layout between steps
    # instead, so these transposes drop out of the per-step path.
    return c1_t.T, h1_t.T


def _reference(w, x, u, h0, c0):
    """Plain-JAX reference matching the PyTorch forward exactly (f32)."""
    i = jax.nn.sigmoid(w[0] @ x + u[0] @ h0)
    f = jax.nn.sigmoid(w[1] @ x + u[1] @ h0)
    o = jax.nn.sigmoid(w[2] @ x + u[2] @ h0)
    c = jnp.tanh(w[3] @ x + u[3] @ h0)
    c1 = f * c0 + i * c
    h1 = o * jnp.tanh(c1)
    return c1, h1


if __name__ == "__main__":
    # Small, deterministic shapes consistent with the module's forward.
    batch = 16
    hidden = 32
    in_dim = 32

    key = jax.random.PRNGKey(0)
    kw, kx, ku, kh, kc = jax.random.split(key, 5)

    w = jax.random.normal(kw, (4, hidden, in_dim), dtype=jnp.float32) * 0.1
    x = jax.random.normal(kx, (in_dim, batch), dtype=jnp.float32)
    u = jax.random.normal(ku, (4, hidden, hidden), dtype=jnp.float32) * 0.1
    h0 = jax.random.normal(kh, (hidden, batch), dtype=jnp.float32)
    c0 = jax.random.normal(kc, (hidden, batch), dtype=jnp.float32)

    c1_ref, h1_ref = _reference(w, x, u, h0, c0)

    # f32-operand path: must match the reference tightly.
    c1_f32, h1_f32 = jax.block_until_ready(
        lstm_cell(w, x, u, h0, c0, compute_dtype=jnp.float32))
    assert jnp.allclose(c1_f32, c1_ref, atol=1e-5, rtol=1e-5)
    assert jnp.allclose(h1_f32, h1_ref, atol=1e-5, rtol=1e-5)

    # Default bf16-operand path (f32 accumulation): looser tolerance.
    c1_bf, h1_bf = jax.block_until_ready(lstm_cell(w, x, u, h0, c0))
    assert jnp.allclose(c1_bf, c1_ref, atol=3e-2, rtol=3e-2)
    assert jnp.allclose(h1_bf, h1_ref, atol=3e-2, rtol=3e-2)

    print("KERNEL_OK")
</pallas_src>

<mosaic_0001>
module attributes {stable_mosaic.version = 11 : i64} {
  func.func @_lstm_cell_kernel(%arg0: i32, %arg1: i32, %arg2: i32, %arg3: memref<16x64xf32, #tpu.memory_space<vmem>>, %arg4: memref<64x128xf32, #tpu.memory_space<vmem>>, %arg5: memref<16x32xf32, #tpu.memory_space<vmem>>, %arg6: memref<16x32xf32, #tpu.memory_space<vmem>>, %arg7: memref<16x32xf32, #tpu.memory_space<vmem>>, %arg8: memref<16x128xf32, #tpu.memory_space<vmem>>) attributes {dimension_semantics = [#tpu.dimension_semantics<parallel>, #tpu.dimension_semantics<parallel>, #tpu.dimension_semantics<arbitrary>], iteration_bounds = array<i64: 1, 1, 1>, scalar_prefetch = 0 : i64, scratch_operands = 1 : i64, tpu.core_type = #tpu.core_type<tc>, window_params = [{transform_indices = @transform_0, window_bounds = array<i64: 16, 64>}, {transform_indices = @transform_1, window_bounds = array<i64: 64, 128>}, {transform_indices = @transform_2, window_bounds = array<i64: 16, 32>}, {transform_indices = @transform_3, window_bounds = array<i64: 16, 32>}, {transform_indices = @transform_4, window_bounds = array<i64: 16, 32>}]} {
    %c0_i32 = arith.constant 0 : i32
    %0 = arith.cmpi eq, %arg2, %c0_i32 : i32
    %1 = arith.extui %0 : i1 to i32
    %c0_i32_0 = arith.constant 0 : i32
    %2 = arith.cmpi ne, %1, %c0_i32_0 : i32
    scf.if %2 {
      %cst_10 = arith.constant 0.000000e+00 : f32
      %12 = vector.broadcast %cst_10 : f32 to vector<16x128xf32>
      %c0_11 = arith.constant 0 : index
      %c0_12 = arith.constant 0 : index
      %13 = vector.load %arg8[%c0_11, %c0_12] : memref<16x128xf32, #tpu.memory_space<vmem>>, vector<16x128xf32>
      tpu.vector_store %arg8[%c0_11, %c0_12], %12 {strides = array<i32>} : memref<16x128xf32, #tpu.memory_space<vmem>>, vector<16x128xf32>,
    } else {
    }
    %c0 = arith.constant 0 : index
    %c0_1 = arith.constant 0 : index
    %3 = vector.load %arg8[%c0, %c0_1] : memref<16x128xf32, #tpu.memory_space<vmem>>, vector<16x128xf32>
    %c0_2 = arith.constant 0 : index
    %c0_3 = arith.constant 0 : index
    %4 = vector.load %arg3[%c0_2, %c0_3] : memref<16x64xf32, #tpu.memory_space<vmem>>, vector<16x64xf32>
    %c0_4 = arith.constant 0 : index
    %c0_5 = arith.constant 0 : index
    %5 = vector.load %arg4[%c0_4, %c0_5] : memref<64x128xf32, #tpu.memory_space<vmem>>, vector<64x128xf32>
    %cst = arith.constant dense<0.000000e+00> : vector<16x128xf32>
    %6 = tpu.matmul %4, %5, %cst {dimension_numbers = #tpu.dot_dimension_numbers<[1], [0], [0], [1], [0, 0, 1, 1], [], []>} : vector<16x64xf32>, vector<64x128xf32>, vector<16x128xf32> -> vector<16x128xf32>
    %7 = arith.addf %3, %6 : vector<16x128xf32>
    %c0_6 = arith.constant 0 : index
    %c0_7 = arith.constant 0 : index
    %8 = vector.load %arg8[%c0_6, %c0_7] : memref<16x128xf32, #tpu.memory_space<vmem>>, vector<16x128xf32>
    tpu.vector_store %arg8[%c0_6, %c0_7], %7 {strides = array<i32>} : memref<16x128xf32, #tpu.memory_space<vmem>>, vector<16x128xf32>,
    %c0_i32_8 = arith.constant 0 : i32
    %9 = arith.cmpi eq, %arg2, %c0_i32_8 : i32
    %10 = arith.extui %9 : i1 to i32
    %c0_i32_9 = arith.constant 0 : i32
    %11 = arith.cmpi ne, %10, %c0_i32_9 : i32
    scf.if %11 {
      %c0_10 = arith.constant 0 : index
      %c0_11 = arith.constant 0 : index
      %12 = vector.load %arg8[%c0_10, %c0_11] : memref<16x128xf32, #tpu.memory_space<vmem>>, vector<16x128xf32>
      %13 = vector.extract_strided_slice %12 {offsets = [0, 0], sizes = [16, 32], strides = [1, 1]} : vector<16x128xf32> to vector<16x32xf32>
      %14 = arith.negf %13 : vector<16x32xf32>
      %15 = math.exp %14 : vector<16x32xf32>
      %cst_12 = arith.constant 1.000000e+00 : f32
      %16 = vector.broadcast %cst_12 : f32 to vector<16x32xf32>
      %17 = arith.addf %16, %15 : vector<16x32xf32>
      %18 = arith.divf %16, %17 : vector<16x32xf32>
      %19 = vector.extract_strided_slice %12 {offsets = [0, 32], sizes = [16, 32], strides = [1, 1]} : vector<16x128xf32> to vector<16x32xf32>
      %20 = arith.negf %19 : vector<16x32xf32>
      %21 = math.exp %20 : vector<16x32xf32>
      %cst_13 = arith.constant 1.000000e+00 : f32
      %22 = vector.broadcast %cst_13 : f32 to vector<16x32xf32>
      %23 = arith.addf %22, %21 : vector<16x32xf32>
      %24 = arith.divf %22, %23 : vector<16x32xf32>
      %25 = vector.extract_strided_slice %12 {offsets = [0, 64], sizes = [16, 32], strides = [1, 1]} : vector<16x128xf32> to vector<16x32xf32>
      %26 = arith.negf %25 : vector<16x32xf32>
      %27 = math.exp %26 : vector<16x32xf32>
      %cst_14 = arith.constant 1.000000e+00 : f32
      %28 = vector.broadcast %cst_14 : f32 to vector<16x32xf32>
      %29 = arith.addf %28, %27 : vector<16x32xf32>
      %30 = arith.divf %28, %29 : vector<16x32xf32>
      %31 = vector.extract_strided_slice %12 {offsets = [0, 96], sizes = [16, 32], strides = [1, 1]} : vector<16x128xf32> to vector<16x32xf32>
      %32 = math.tanh %31 : vector<16x32xf32>
      %c0_15 = arith.constant 0 : index
      %c0_16 = arith.constant 0 : index
      %33 = vector.load %arg5[%c0_15, %c0_16] : memref<16x32xf32, #tpu.memory_space<vmem>>, vector<16x32xf32>
      %34 = arith.mulf %24, %33 : vector<16x32xf32>
      %35 = arith.mulf %18, %32 : vector<16x32xf32>
      %36 = arith.addf %34, %35 : vector<16x32xf32>
      %37 = math.tanh %36 : vector<16x32xf32>
      %38 = arith.mulf %30, %37 : vector<16x32xf32>
      %c0_17 = arith.constant 0 : index
      %c0_18 = arith.constant 0 : index
      %39 = vector.load %arg6[%c0_17, %c0_18] : memref<16x32xf32, #tpu.memory_space<vmem>>, vector<16x32xf32>
      tpu.vector_store %arg6[%c0_17, %c0_18], %36 {strides = array<i32>} : memref<16x32xf32, #tpu.memory_space<vmem>>, vector<16x32xf32>,
      %c0_19 = arith.constant 0 : index
      %c0_20 = arith.constant 0 : index
      %40 = vector.load %arg7[%c0_19, %c0_20] : memref<16x32xf32, #tpu.memory_space<vmem>>, vector<16x32xf32>
      tpu.vector_store %arg7[%c0_19, %c0_20], %38 {strides = array<i32>} : memref<16x32xf32, #tpu.memory_space<vmem>>, vector<16x32xf32>,
    } else {
    }
    return
  }
  func.func @transform_0(%arg0: i32, %arg1: i32, %arg2: i32) -> (i32, i32) {
    %c0_i32 = arith.constant 0 : i32
    return %arg0, %arg2 : i32, i32
  }
  func.func @transform_1(%arg0: i32, %arg1: i32, %arg2: i32) -> (i32, i32) {
    %c0_i32 = arith.constant 0 : i32
    return %arg2, %arg1 : i32, i32
  }
  func.func @transform_2(%arg0: i32, %arg1: i32, %arg2: i32) -> (i32, i32) {
    %c0_i32 = arith.constant 0 : i32
    return %arg0, %arg1 : i32, i32
  }
  func.func @transform_3(%arg0: i32, %arg1: i32, %arg2: i32) -> (i32, i32) {
    %c0_i32 = arith.constant 0 : i32
    return %arg0, %arg1 : i32, i32
  }
  func.func @transform_4(%arg0: i32, %arg1: i32, %arg2: i32) -> (i32, i32) {
    %c0_i32 = arith.constant 0 : i32
    return %arg0, %arg1 : i32, i32
  }
}

</mosaic_0001>

<llo_original>
// kernel: tpu_custom_call.1
$region0: #{tpu_custom_call.1}
  #allocation0 [shape = 'u32[]', space=smem, size = 0x4, offset = 0x4, fixed_abs, tag = 'smem constant byte address 0x4 - core index']
  #allocation1 [shape = 'u32[144,128]{1,0:T(1,128)}', space=vmem, size = 0x12000, scoped, tag = 'internal scratch']
  #allocation2 [shape = 'f32[16,128]{1,0:T(8,128)}', space=vmem, size = 0x2000, scoped, tag = 'scratch operand']
  %s0 = inlined_call_operand.hbm [shape: f32[16,64], index: 0, kind: input, shape index: {}]
  %s1 = inlined_call_operand.hbm [shape: f32[64,128], index: 1, kind: input, shape index: {}]
  %s2 = inlined_call_operand.hbm [shape: f32[16,32], index: 2, kind: input, shape index: {}]
  %s3 = inlined_call_operand.hbm [shape: f32[16,32], index: 3, kind: output, shape index: {0}]
  %s4 = inlined_call_operand.hbm [shape: f32[16,32], index: 4, kind: output, shape index: {1}]
  %5 = xla_tuple %s3, %s4
  %s6 = sld [smem:[#allocation0]]
  $region50: #{tpu_custom_call.1} parent=0
    _
  %s8 = ssub.s32 1, %s6
  %s9 = scalar_select 0, %s8, %s6
  $region1: #{tpu_custom_call.1} parent=0
    #allocation3 [shape = 'u8[8192]{0}', space=vmem, size = 0x2000, scoped, tag = 'input window, operand 0, single buffered']
    #allocation4 [shape = 's32[1]{0}', space=sflag, size = 0x4, scoped, tag = 'scoped memory for tpu_custom_call.1']
    #allocation5 [shape = 's32[1]{0}', space=sflag, size = 0x4, scoped, tag = 'scoped memory for tpu_custom_call.1']
    #allocation6 [shape = 'u8[32768]{0}', space=vmem, size = 0x8000, scoped, tag = 'input window, operand 1, single buffered']
    #allocation7 [shape = 's32[1]{0}', space=sflag, size = 0x4, scoped, tag = 'scoped memory for tpu_custom_call.1']
    #allocation8 [shape = 'u8[8192]{0}', space=vmem, size = 0x2000, scoped, tag = 'input window, operand 2, single buffered']
    #allocation9 [shape = 'u8[8192]{0}', space=vmem, size = 0x2000, scoped, tag = 'output window, operand 0, single buffered']
    #allocation10 [shape = 'u8[8192]{0}', space=vmem, size = 0x2000, scoped, tag = 'output window, operand 1, single buffered']
    #allocation11 [shape = 's32[1]{0}', space=sflag, size = 0x4, scoped, tag = 'scoped memory for tpu_custom_call.1']
    %10 = vsyncpa [#allocation4], 0
    %11 = vsyncpa [#allocation7], 0
    %12 = vsyncpa [#allocation5], 0
    %13 = vsyncpa [#allocation11], 0
    // Predicated region
    $region2: #{tpu_custom_call.1} parent=1 // pred_check
      _
    $region3: #{tpu_custom_call.1} parent=1 // pred_check_branch
      %15 = sbr.rel (0) target = $region5
    $region4: #{tpu_custom_call.1} parent=1 // pred_region
      %s17 = ssub.s32 256, 256
      %18 = vsyncadd [#allocation4], %s17
      %s19 = sshll.u32 [#allocation3], 4
      %s20 = int_to_ptr.vmem [resolvable:$true] %s19
      %25 = dma.hbm_to_vmem [thread:$0]  %s0, 256, %s20, [#allocation4], 128, 128, 8
    $region5: #{tpu_custom_call.1} parent=1 // pred_fallthru
      _
    // Predicated region
    $region6: #{tpu_custom_call.1} parent=1 // pred_check
      _
    $region7: #{tpu_custom_call.1} parent=1 // pred_check_branch
      %27 = sbr.rel (0) target = $region9
    $region8: #{tpu_custom_call.1} parent=1 // pred_region
      %s29 = ssub.s32 1024, 1024
      %30 = vsyncadd [#allocation7], %s29
      %s31 = sshll.u32 [#allocation6], 4
      %s32 = int_to_ptr.vmem [resolvable:$true] %s31
      %37 = dma.hbm_to_vmem [thread:$0]  %s1, 1024, %s32, [#allocation7], 128, 128, 8
    $region9: #{tpu_custom_call.1} parent=1 // pred_fallthru
      _
    // Predicated region
    $region10: #{tpu_custom_call.1} parent=1 // pred_check
      _
    $region11: #{tpu_custom_call.1} parent=1 // pred_check_branch
      %39 = sbr.rel (0) target = $region13
    $region12: #{tpu_custom_call.1} parent=1 // pred_region
      %s41 = ssub.s32 256, 256
      %42 = vsyncadd [#allocation7], %s41
      %s43 = sshll.u32 [#allocation8], 4
      %s44 = int_to_ptr.vmem [resolvable:$true] %s43
      %49 = dma.hbm_to_vmem [thread:$0]  %s2, 256, %s44, [#allocation7], 128, 128, 8
    $region13: #{tpu_custom_call.1} parent=1 // pred_fallthru
      _
    // Predicated region
    $region14: #{tpu_custom_call.1} parent=1 // pred_check
      _
    $region15: #{tpu_custom_call.1} parent=1 // pred_check_branch
      %51 = sbr.rel (0) target = $region17
    $region16: #{tpu_custom_call.1} parent=1 // pred_region
      %52 = dma.done [#allocation4], 256
    $region17: #{tpu_custom_call.1} parent=1 // pred_fallthru
      _
    // Predicated region
    $region18: #{tpu_custom_call.1} parent=1 // pred_check
      _
    $region19: #{tpu_custom_call.1} parent=1 // pred_check_branch
      %54 = sbr.rel (0) target = $region21
    $region20: #{tpu_custom_call.1} parent=1 // pred_region
      %55 = dma.done [#allocation7], 1024
    $region21: #{tpu_custom_call.1} parent=1 // pred_fallthru
      _
    // Predicated region
    $region22: #{tpu_custom_call.1} parent=1 // pred_check
      _
    $region23: #{tpu_custom_call.1} parent=1 // pred_check_branch
      %57 = sbr.rel (0) target = $region25
    $region24: #{tpu_custom_call.1} parent=1 // pred_region
      %58 = dma.done [#allocation7], 256
    $region25: #{tpu_custom_call.1} parent=1 // pred_fallthru
      _
    %p59 = scmp.eq.s32.totalorder 0, 0
    // Predicated region
    $region26: #{tpu_custom_call.1} parent=1 // pred_check
      %p60 = pneg %p59
    $region27: #{tpu_custom_call.1} parent=1 // pred_check_branch
      %62 = sbr.rel (%p60) target = $region29
    $region28: #{tpu_custom_call.1} parent=1 // pred_region
      %63 = vst [vmem:[#allocation2] sm:$0xff] 0.0
      %64 = vst [vmem:[#allocation2 + $0x8] sm:$0xff] 0.0
    $region29: #{tpu_custom_call.1} parent=1 // pred_fallthru
      _
    %v65 = vld [vmem:[#allocation2] sm:$0xff]
    %v66 = vld [vmem:[#allocation2 + $0x8] sm:$0xff]
    %v67 = vld [vmem:[#allocation3] sm:$0xff]
    %v68 = vld [vmem:[#allocation3 + $0x8] sm:$0xff]
    %v69 = vld [vmem:[#allocation6] sm:$0xff]
    %v70 = vld [vmem:[#allocation6 + $0x8] sm:$0xff]
    %v71 = vld [vmem:[#allocation6 + $0x10] sm:$0xff]
    %v72 = vld [vmem:[#allocation6 + $0x18] sm:$0xff]
    %v73 = vld [vmem:[#allocation6 + $0x20] sm:$0xff]
    %v74 = vld [vmem:[#allocation6 + $0x28] sm:$0xff]
    %v75 = vld [vmem:[#allocation6 + $0x30] sm:$0xff]
    %v76 = vld [vmem:[#allocation6 + $0x38] sm:$0xff]
    %vm77 = vcmask 523264
    %v79 = vsel %vm77, %v67, 0
    %v82 = vsel %vm77, %v68, 0
    %84 = vmatprep.subr.mxu0 0.0
    %85 = vmatpush1.msra.mxu0 0.0
    %86 = vmatprep.subr.mxu0 0.0
    %87 = vmatpush1.msra.mxu0 0.0
    %88 = vmatprep.subr.mxu0 0.0
    %89 = vmatpush1.msra.mxu0 0.0
    %90 = vmatprep.subr.mxu0 0.0
    %91 = vmatpush1.msra.mxu0 0.0
    %92 = vmatprep.subr.mxu0 0.0
    %93 = vmatpush1.msra.mxu0 0.0
    %94 = vmatprep.subr.mxu0 0.0
    %95 = vmatpush1.msra.mxu0 0.0
    %96 = vmatprep.subr.mxu0 0.0
    %97 = vmatpush1.msra.mxu0 0.0
    %98 = vmatprep.subr.mxu0 0.0
    %99 = vmatpush1.msra.mxu0 0.0
    %100 = vmatprep.subr.mxu0 0.0
    %101 = vmatpush1.msra.mxu0 %v76
    %102 = vmatprep.subr.mxu0 0.0
    %103 = vmatpush1.msra.mxu0 %v75
    %104 = vmatprep.subr.mxu0 0.0
    %105 = vmatpush1.msra.mxu0 %v74
    %106 = vmatprep.subr.mxu0 0.0
    %107 = vmatpush1.msra.mxu0 %v73
    %108 = vmatprep.subr.mxu0 0.0
    %109 = vmatpush1.msra.mxu0 %v72
    %110 = vmatprep.subr.mxu0 0.0
    %111 = vmatpush1.msra.mxu0 %v71
    %112 = vmatprep.subr.mxu0 0.0
    %113 = vmatpush1.msra.mxu0 %v70
    %114 = vmatprep.subr.mxu0 0.0
    %115 = vmatpush1.msra.mxu0 %v69
    %116 = vmatprep.subr.mxu0 0.0
    %117 = vmatpush2.msra.mxu0 0.0
    %118 = vmatprep.subr.mxu0 0.0
    %119 = vmatpush2.msra.mxu0 0.0
    %120 = vmatprep.subr.mxu0 0.0
    %121 = vmatpush2.msra.mxu0 0.0
    %122 = vmatprep.subr.mxu0 0.0
    %123 = vmatpush2.msra.mxu0 0.0
    %124 = vmatprep.subr.mxu0 0.0
    %125 = vmatpush2.msra.mxu0 0.0
    %126 = vmatprep.subr.mxu0 0.0
    %127 = vmatpush2.msra.mxu0 0.0
    %128 = vmatprep.subr.mxu0 0.0
    %129 = vmatpush2.msra.mxu0 0.0
    %130 = vmatprep.subr.mxu0 0.0
    %131 = vmatpush2.msra.mxu0 0.0
    %132 = vmatprep.subr.mxu0 0.0
    %133 = vmatpush2.msra.mxu0 0.0
    %134 = vmatprep.subr.mxu0 0.0
    %135 = vmatpush2.msra.mxu0 0.0
    %136 = vmatprep.subr.mxu0 0.0
    %137 = vmatpush2.msra.mxu0 0.0
    %138 = vmatprep.subr.mxu0 0.0
    %139 = vmatpush2.msra.mxu0 0.0
    %140 = vmatprep.subr.mxu0 0.0
    %141 = vmatpush2.msra.mxu0 0.0
    %142 = vmatprep.subr.mxu0 0.0
    %143 = vmatpush2.msra.mxu0 0.0
    %144 = vmatprep.subr.mxu0 0.0
    %145 = vmatpush2.msra.mxu0 0.0
    %146 = vmatprep.subr.mxu0 0.0
    %147 = vmatpush2.msra.mxu0 0.0
    %148 = vmatprep.mubr.f32.mxu0 0.0
    %149 = vmatmul.mubr.f32.gmra.mxu0 %v79
    %v150 = vpop.f32.mrf.mxu0
    %v151 = vadd.f32 0.0, %v150
    %v152 = vpop.f32.mrf.mxu0
    %153 = vmatprep.mubr.f32.mxu0 0.0
    %154 = vmatmul.mubr.f32.gmra.mxu0 %v82
    %v155 = vpop.f32.mrf.mxu0
    %v156 = vadd.f32 0.0, %v155
    %v157 = vpop.f32.mrf.mxu0
    %158 = vdwg.mxu0
    %v159 = vadd.f32 %v65, %v151
    %v160 = vadd.f32 %v66, %v156
    %161 = vst [vmem:[#allocation2] sm:$0xff] %v159
    %162 = vst [vmem:[#allocation2 + $0x8] sm:$0xff] %v160
    // Predicated region
    $region30: #{tpu_custom_call.1} parent=1 // pred_check
      %p163 = pneg %p59
    $region31: #{tpu_custom_call.1} parent=1 // pred_check_branch
      %165 = sbr.rel (%p163) target = $region33
    $region32: #{tpu_custom_call.1} parent=1 // pred_region
      %v166 = vld [vmem:[#allocation2] sm:$0xff]
      %v167 = vld [vmem:[#allocation2 + $0x8] sm:$0xff]
      %v168 = vxor.u32 %v166, 2147483648
      %v169 = vxor.u32 %v167, 2147483648
      %v170 = vmul.f32 %v168, 1.442695
      %v171 = vpow.pop %v170
      %v172 = vmul.f32 %v169, 1.442695
      %v173 = vpow.pop %v172
      %v174 = vadd.f32 %v171, 1.0
      %v175 = vadd.f32 %v173, 1.0
      %v176 = vrcp.pop %v174
      %v177 = vmul.f32 1.0, %v176
      %v178 = vrcp.pop %v175
      %v179 = vmul.f32 1.0, %v178
      %v180 = vtanh.pop %v166
      %v181 = vtanh.pop %v167
      %v182 = vld [vmem:[#allocation8] sm:$0xff]
      %v183 = vld [vmem:[#allocation8 + $0x8] sm:$0xff]
      %186 = vrot.lane.b32.xlu0 %v182, 32
      %v187 = vpop.permute.xlu0 %186
      %188 = vrot.lane.b32.xlu0 %v183, 32
      %v189 = vpop.permute.xlu0 %188
      %v192 = vmul.f32 %v177, %v187
      %v193 = vmul.f32 %v179, %v189
      %196 = vrot.lane.b32.xlu0 %v180, 32
      %v197 = vpop.permute.xlu0 %196
      %198 = vrot.lane.b32.xlu0 %v181, 32
      %v199 = vpop.permute.xlu0 %198
      %v202 = vmul.f32 %v177, %v197
      %v203 = vmul.f32 %v179, %v199
      %206 = vrot.lane.b32.xlu0 %v202, 32
      %v207 = vpop.permute.xlu0 %206
      %208 = vrot.lane.b32.xlu0 %v203, 32
      %v209 = vpop.permute.xlu0 %208
      %v212 = vadd.f32 %v192, %v207
      %v213 = vadd.f32 %v193, %v209
      %v214 = vtanh.pop %v212
      %v215 = vtanh.pop %v213
      %218 = vrot.lane.b32.xlu0 %v214, 32
      %v219 = vpop.permute.xlu0 %218
      %220 = vrot.lane.b32.xlu0 %v215, 32
      %v221 = vpop.permute.xlu0 %220
      %v224 = vmul.f32 %v177, %v219
      %v225 = vmul.f32 %v179, %v221
      %228 = vrot.lane.b32.xlu0 %v212, 96
      %v229 = vpop.permute.xlu0 %228
      %230 = vrot.lane.b32.xlu0 %v213, 96
      %v231 = vpop.permute.xlu0 %230
      %vm234 = vcmask 261120
      %235 = vst.msk [vmem:[#allocation9] sm:$0xff] %vm234, %v229
      %236 = vst.msk [vmem:[#allocation9 + $0x8] sm:$0xff] %vm234, %v231
      %239 = vrot.lane.b32.xlu0 %v224, 64
      %v240 = vpop.permute.xlu0 %239
      %241 = vrot.lane.b32.xlu0 %v225, 64
      %v242 = vpop.permute.xlu0 %241
      %245 = vst.msk [vmem:[#allocation10] sm:$0xff] %vm234, %v240
      %246 = vst.msk [vmem:[#allocation10 + $0x8] sm:$0xff] %vm234, %v242
    $region33: #{tpu_custom_call.1} parent=1 // pred_fallthru
      _
    // Predicated region
    $region34: #{tpu_custom_call.1} parent=1 // pred_check
      _
    $region35: #{tpu_custom_call.1} parent=1 // pred_check_branch
      %248 = sbr.rel (0) target = $region37
    $region36: #{tpu_custom_call.1} parent=1 // pred_region
      %s250 = ssub.s32 256, 256
      %251 = vsyncadd [#allocation5], %s250
      %s252 = sshll.u32 [#allocation9], 4
      %s253 = int_to_ptr.vmem [resolvable:$true] %s252
      %258 = dma.vmem_to_hbm [thread:$0]  %s253, 256, %s3, [#allocation5], 128, 128, 8
    $region37: #{tpu_custom_call.1} parent=1 // pred_fallthru
      _
    // Predicated region
    $region38: #{tpu_custom_call.1} parent=1 // pred_check
      _
    $region39: #{tpu_custom_call.1} parent=1 // pred_check_branch
      %260 = sbr.rel (0) target = $region41
    $region40: #{tpu_custom_call.1} parent=1 // pred_region
      %s262 = ssub.s32 256, 256
      %263 = vsyncadd [#allocation11], %s262
      %s264 = sshll.u32 [#allocation10], 4
      %s265 = int_to_ptr.vmem [resolvable:$true] %s264
      %270 = dma.vmem_to_hbm [thread:$0]  %s265, 256, %s4, [#allocation11], 128, 128, 8
    $region41: #{tpu_custom_call.1} parent=1 // pred_fallthru
      _
    // Predicated region
    $region42: #{tpu_custom_call.1} parent=1 // pred_check
      _
    $region43: #{tpu_custom_call.1} parent=1 // pred_check_branch
      %272 = sbr.rel (0) target = $region45
    $region44: #{tpu_custom_call.1} parent=1 // pred_region
      %273 = dma.done [#allocation5], 256
    $region45: #{tpu_custom_call.1} parent=1 // pred_fallthru
      _
    // Predicated region
    $region46: #{tpu_custom_call.1} parent=1 // pred_check
      _
    $region47: #{tpu_custom_call.1} parent=1 // pred_check_branch
      %275 = sbr.rel (0) target = $region49
    $region48: #{tpu_custom_call.1} parent=1 // pred_region
      %276 = dma.done [#allocation11], 256
    $region49: #{tpu_custom_call.1} parent=1 // pred_fallthru
      _
    %277 = vsyncpa [#allocation4], 1
    %278 = vsyncpa [#allocation7], 1
    %279 = vsyncpa [#allocation5], 1
    %280 = vsyncpa [#allocation11], 1

</llo_original>
